<compile_context>
chip_gen: v6e
topology: v6e:2x2x1
jax: 0.10.0
libtpu: 0.0.40
codegen_flags: <defaults>
</compile_context>

<pallas_src>
import jax
import jax.numpy as jnp
from jax.experimental import pallas as pl
from jax.experimental.pallas import tpu as pltpu


# --------------------------------------------------------------------------- helpers

def _softmax_rows(dots_f32):
    """Numerically-stable softmax over the last axis (f32 in, f32 out)."""
    m = jnp.max(dots_f32, axis=-1, keepdims=True)
    p = jnp.exp(dots_f32 - m)
    denom = jnp.sum(p, axis=-1, keepdims=True)
    return p * pl.reciprocal(denom, approx=True)


def _split_heads(t2d_f32, n, heads, dim_head):
    """(n, heads*dim_head) f32 -> (heads, n, dim_head) f32."""
    return jnp.transpose(t2d_f32.reshape(n, heads, dim_head), (1, 0, 2))


def _merge_heads(t3d, n, heads, dim_head):
    """(heads, n, dim_head) -> (n, heads*dim_head)."""
    return jnp.transpose(t3d, (1, 0, 2)).reshape(n, heads * dim_head)


# --------------------------------------------------------------------------- kernels

def _make_fused_kernel(heads, dim_head, n_tokens):
    """Single-query-tile kernel: whole sequence per grid step (grid = (B,))."""
    H, dh, N = heads, dim_head, n_tokens
    inner = H * dh
    f32, bf16 = jnp.float32, jnp.bfloat16

    def kernel(x_ref, w_qkv_ref, wo_ref, b_ref, o_ref):
        x = x_ref[0]                                                    # (N, D) bf16
        # Single lane-dense projection: (N, D) @ (D, 3*inner) on the MXU, f32 acc.
        qkv = jnp.dot(x, w_qkv_ref[...], preferred_element_type=f32)   # (N, 3*inner)

        q = _split_heads(qkv[:, :inner], N, H, dh).astype(bf16)        # (H, N, dh)
        k = _split_heads(qkv[:, inner:2 * inner], N, H, dh).astype(bf16)
        v = _split_heads(qkv[:, 2 * inner:], N, H, dh).astype(bf16)

        # Scaled dot-product attention (scale already folded into the Q weights).
        dots = jnp.einsum('hqd,hkd->hqk', q, k, preferred_element_type=f32)
        attn = _softmax_rows(dots).astype(bf16)                         # (H, N, N)
        out = jnp.einsum('hqk,hkd->hqd', attn, v, preferred_element_type=f32)

        # Head merge + single (N, inner) x (inner, D) output projection + bias.
        out2d = _merge_heads(out, N, H, dh).astype(bf16)
        y = jnp.dot(out2d, wo_ref[...], preferred_element_type=f32) + b_ref[...]
        o_ref[0] = y.astype(o_ref.dtype)

    return kernel


def _make_tiled_kernel(heads, dim_head, n_tokens, q_tile):
    """Query-tiled kernel (grid = (B, N // q_tile)).

    K/V for the full sequence are computed once per batch element (t == 0) into
    VMEM scratch and carried across the query-tile axis.
    """
    H, dh, N, tq = heads, dim_head, n_tokens, q_tile
    inner = H * dh
    f32, bf16 = jnp.float32, jnp.bfloat16

    def kernel(xq_ref, xkv_ref, wq_ref, wkv_ref, wo_ref, b_ref, o_ref,
               k_scr, v_scr):
        @pl.when(pl.program_id(1) == 0)
        def _():
            xkv = xkv_ref[0]                                            # (N, D) bf16
            kv = jnp.dot(xkv, wkv_ref[...], preferred_element_type=f32)  # (N, 2*inner)
            k_scr[...] = _split_heads(kv[:, :inner], N, H, dh).astype(bf16)
            v_scr[...] = _split_heads(kv[:, inner:], N, H, dh).astype(bf16)

        xq = xq_ref[0]                                                  # (tq, D) bf16
        q = jnp.dot(xq, wq_ref[...], preferred_element_type=f32)        # (tq, inner)
        q = _split_heads(q, tq, H, dh).astype(bf16)                     # (H, tq, dh)

        dots = jnp.einsum('hqd,hkd->hqk', q, k_scr[...],
                          preferred_element_type=f32)                   # (H, tq, N)
        attn = _softmax_rows(dots).astype(bf16)
        out = jnp.einsum('hqk,hkd->hqd', attn, v_scr[...],
                         preferred_element_type=f32)                    # (H, tq, dh)

        out2d = _merge_heads(out, tq, H, dh).astype(bf16)
        y = jnp.dot(out2d, wo_ref[...], preferred_element_type=f32) + b_ref[...]
        o_ref[0] = y.astype(o_ref.dtype)

    return kernel


# --------------------------------------------------------------------------- wrappers

def prepare_attention_params(w_qkv, w_out, b_out, *, heads, dim_head):
    """One-time weight transform (do at parameter-load time).

    PyTorch layouts in:
      w_qkv : (3*inner, D)  -- nn.Linear(dim, 3*inner, bias=False).weight
      w_out : (D, inner)    -- nn.Linear(inner, dim).weight
      b_out : (D,)          -- nn.Linear(inner, dim).bias

    Returns lane-dense bf16 weights:
      w_all : (D, 3*inner)  columns ordered [q | k | v], 1/sqrt(dim_head) folded into q
      wo    : (inner, D)
      b     : (1, D) f32
    """
    inner = heads * dim_head
    D = w_qkv.shape[1]
    scale = dim_head ** (-0.5)

    w_all = jnp.transpose(w_qkv)                                        # (D, 3*inner)
    w_all = jnp.concatenate([w_all[:, :inner] * scale, w_all[:, inner:]], axis=1)
    wo = jnp.transpose(w_out)                                           # (inner, D)
    return (w_all.astype(jnp.bfloat16), wo.astype(jnp.bfloat16),
            b_out.reshape(1, D).astype(jnp.float32))


def attention_forward(x, params, *, heads, dim_head, q_tile=256,
                      vmem_limit_bytes=64 * 1024 * 1024):
    """x: (B, N, D) float32.  params: output of prepare_attention_params."""
    w_all, wo, b2 = params
    B, N, D = x.shape
    H, dh = heads, dim_head
    inner = H * dh

    # bf16 at the kernel boundary halves HBM->VMEM DMA bytes for x.
    x_bf = x.astype(jnp.bfloat16)

    # TODO(synk): when N is not a multiple of q_tile we fall back to a single
    #             whole-sequence tile; a padded-tile path would bound VMEM for
    #             large non-divisible N (matters most on v7x's 64 MiB VMEM).
    tq = q_tile if (N % q_tile == 0) else N
    n_q_tiles = N // tq

    if n_q_tiles == 1:
        kernel = _make_fused_kernel(H, dh, N)
        grid = (B,)
        in_specs = [
            pl.BlockSpec((1, N, D), lambda b: (b, 0, 0)),               # x
            pl.BlockSpec((D, 3 * inner), lambda b: (0, 0)),             # qkv slab
            pl.BlockSpec((inner, D), lambda b: (0, 0)),                 # out proj
            pl.BlockSpec((1, D), lambda b: (0, 0)),                     # bias
        ]
        out_spec = pl.BlockSpec((1, N, D), lambda b: (b, 0, 0))
        scratch = []
        dims = ("parallel",)
        args = (x_bf, w_all, wo, b2)
    else:
        kernel = _make_tiled_kernel(H, dh, N, tq)
        grid = (B, n_q_tiles)
        in_specs = [
            pl.BlockSpec((1, tq, D), lambda b, t: (b, t, 0)),           # query-row tile
            pl.BlockSpec((1, N, D), lambda b, t: (b, 0, 0)),            # full seq (K/V src)
            pl.BlockSpec((D, inner), lambda b, t: (0, 0)),              # w_q (scale folded)
            pl.BlockSpec((D, 2 * inner), lambda b, t: (0, 0)),          # w_kv
            pl.BlockSpec((inner, D), lambda b, t: (0, 0)),              # out proj
            pl.BlockSpec((1, D), lambda b, t: (0, 0)),                  # bias
        ]
        out_spec = pl.BlockSpec((1, tq, D), lambda b, t: (b, t, 0))
        scratch = [pltpu.VMEM((H, N, dh), jnp.bfloat16),                # K per-head
                   pltpu.VMEM((H, N, dh), jnp.bfloat16)]                # V per-head
        # Scratch K/V carries across the t axis -> "arbitrary"; B stays "parallel"
        # so megacore sharding (v7x: 2 TCs) survives.
        dims = ("parallel", "arbitrary")
        args = (x_bf, x_bf, w_all[:, :inner], w_all[:, inner:], wo, b2)

    return pl.pallas_call(
        kernel,
        out_shape=jax.ShapeDtypeStruct((B, N, D), x.dtype),
        grid_spec=pltpu.PrefetchScalarGridSpec(
            num_scalar_prefetch=0,
            grid=grid,
            in_specs=in_specs,
            out_specs=out_spec,
            scratch_shapes=scratch,
        ),
        compiler_params=pltpu.CompilerParams(
            dimension_semantics=dims,
            vmem_limit_bytes=vmem_limit_bytes,
        ),
    )(*args)


def attention_reference(x, w_qkv, w_out, b_out, *, heads, dim_head):
    """Pure-JAX (f32) reference mirroring the PyTorch forward."""
    B, N, D = x.shape
    inner = heads * dim_head
    qkv = x @ w_qkv.T                                                   # (B, N, 3*inner)
    q, k, v = jnp.split(qkv, 3, axis=-1)

    def to_heads(t):
        return jnp.transpose(t.reshape(B, N, heads, dim_head), (0, 2, 1, 3))

    q, k, v = map(to_heads, (q, k, v))                                  # (B, H, N, dh)
    dots = jnp.einsum("bhnd,bhmd->bhnm", q, k) * (dim_head ** -0.5)
    attn = jax.nn.softmax(dots, axis=-1)
    out = jnp.einsum("bhnm,bhmd->bhnd", attn, v)                        # (B, H, N, dh)
    out = jnp.transpose(out, (0, 2, 1, 3)).reshape(B, N, inner)
    return out @ w_out.T + b_out


if __name__ == "__main__":
    # Small shapes consistent with the module (project_out=True branch).
    B, N, D = 2, 8, 32
    heads, dim_head = 4, 16
    inner = heads * dim_head

    key = jax.random.PRNGKey(0)
    kx, kq, kw, kb, kx2 = jax.random.split(key, 5)
    x = jax.random.normal(kx, (B, N, D), dtype=jnp.float32)
    # nn.Linear layouts: (out_features, in_features); to_qkv has no bias.
    w_qkv = jax.random.normal(kq, (3 * inner, D), dtype=jnp.float32) * 0.05
    w_out = jax.random.normal(kw, (D, inner), dtype=jnp.float32) * 0.05
    b_out = jax.random.normal(kb, (D,), dtype=jnp.float32) * 0.05

    params = prepare_attention_params(w_qkv, w_out, b_out,
                                      heads=heads, dim_head=dim_head)

    # --- test 1: single-tile fused path (whole sequence per grid step).
    y = attention_forward(x, params, heads=heads, dim_head=dim_head)
    y = jax.block_until_ready(y)
    y_ref = attention_reference(x, w_qkv, w_out, b_out,
                                heads=heads, dim_head=dim_head)
    assert y.shape == (B, N, D)
    # bf16 MXU operands + approx reciprocal -> slightly looser tolerance vs f32 ref.
    assert jnp.allclose(y, y_ref, atol=1e-2, rtol=1e-2), "mismatch (fused path)"

    # --- test 2: query-tiled path with K/V scratch carry (N=256, q_tile=128).
    N2 = 256
    x2 = jax.random.normal(kx2, (B, N2, D), dtype=jnp.float32)
    y2 = attention_forward(x2, params, heads=heads, dim_head=dim_head, q_tile=128)
    y2 = jax.block_until_ready(y2)
    y2_ref = attention_reference(x2, w_qkv, w_out, b_out,
                                 heads=heads, dim_head=dim_head)
    assert y2.shape == (B, N2, D)
    assert jnp.allclose(y2, y2_ref, atol=1e-2, rtol=1e-2), "mismatch (tiled path)"

    print("KERNEL_OK")
</pallas_src>

<mosaic_0001>
module attributes {stable_mosaic.version = 11 : i64} {
  func.func @kernel(%arg0: i32, %arg1: memref<1x8x32xbf16, #tpu.memory_space<vmem>>, %arg2: memref<32x192xbf16, #tpu.memory_space<vmem>>, %arg3: memref<64x32xbf16, #tpu.memory_space<vmem>>, %arg4: memref<1x32xf32, #tpu.memory_space<vmem>>, %arg5: memref<1x8x32xf32, #tpu.memory_space<vmem>>) attributes {dimension_semantics = [#tpu.dimension_semantics<parallel>], iteration_bounds = array<i64: 2>, scalar_prefetch = 0 : i64, scratch_operands = 0 : i64, tpu.core_type = #tpu.core_type<tc>, window_params = [{transform_indices = @transform_0, window_bounds = array<i64: 1, 8, 32>}, {pipeline_mode = #tpu.pipeline_mode<synchronous>, transform_indices = @transform_1, window_bounds = array<i64: 32, 192>}, {pipeline_mode = #tpu.pipeline_mode<synchronous>, transform_indices = @transform_2, window_bounds = array<i64: 64, 32>}, {pipeline_mode = #tpu.pipeline_mode<synchronous>, transform_indices = @transform_3, window_bounds = array<i64: 1, 32>}, {transform_indices = @transform_4, window_bounds = array<i64: 1, 8, 32>}]} {
    %c0 = arith.constant 0 : index
    %c0_0 = arith.constant 0 : index
    %c0_1 = arith.constant 0 : index
    %0 = vector.load %arg1[%c0, %c0_0, %c0_1] : memref<1x8x32xbf16, #tpu.memory_space<vmem>>, vector<1x8x32xbf16>
    %1 = vector.shape_cast %0 : vector<1x8x32xbf16> to vector<8x32xbf16>
    %c0_2 = arith.constant 0 : index
    %c0_3 = arith.constant 0 : index
    %2 = vector.load %arg2[%c0_2, %c0_3] : memref<32x192xbf16, #tpu.memory_space<vmem>>, vector<32x192xbf16>
    %cst = arith.constant dense<0.000000e+00> : vector<8x192xf32>
    %3 = tpu.matmul %1, %2, %cst {dimension_numbers = #tpu.dot_dimension_numbers<[1], [0], [0], [1], [0, 0, 1, 1], [], []>} : vector<8x32xbf16>, vector<32x192xbf16>, vector<8x192xf32> -> vector<8x192xf32>
    %4 = vector.extract_strided_slice %3 {offsets = [0, 0], sizes = [8, 64], strides = [1, 1]} : vector<8x192xf32> to vector<8x64xf32>
    %5 = vector.shape_cast %4 : vector<8x64xf32> to vector<8x4x16xf32>
    %6 = tpu.transpose %5, [1, 0, 2] : vector<8x4x16xf32> -> vector<4x8x16xf32>
    %7 = arith.truncf %6 : vector<4x8x16xf32> to vector<4x8x16xbf16>
    %8 = vector.extract_strided_slice %3 {offsets = [0, 64], sizes = [8, 64], strides = [1, 1]} : vector<8x192xf32> to vector<8x64xf32>
    %9 = vector.shape_cast %8 : vector<8x64xf32> to vector<8x4x16xf32>
    %10 = tpu.transpose %9, [1, 0, 2] : vector<8x4x16xf32> -> vector<4x8x16xf32>
    %11 = arith.truncf %10 : vector<4x8x16xf32> to vector<4x8x16xbf16>
    %12 = vector.extract_strided_slice %3 {offsets = [0, 128], sizes = [8, 64], strides = [1, 1]} : vector<8x192xf32> to vector<8x64xf32>
    %13 = vector.shape_cast %12 : vector<8x64xf32> to vector<8x4x16xf32>
    %14 = tpu.transpose %13, [1, 0, 2] : vector<8x4x16xf32> -> vector<4x8x16xf32>
    %15 = arith.truncf %14 : vector<4x8x16xf32> to vector<4x8x16xbf16>
    "tpu.trace_start"() <{level = 10 : i32, message = "hqd,hkd->hqk"}> : () -> ()
    %cst_4 = arith.constant dense<0.000000e+00> : vector<4x8x8xf32>
    %16 = tpu.matmul %7, %11, %cst_4 {dimension_numbers = #tpu.dot_dimension_numbers<[2], [2], [1], [1], [0, 0, 0, 1, 1, 1], [0], [0]>} : vector<4x8x16xbf16>, vector<4x8x16xbf16>, vector<4x8x8xf32> -> vector<4x8x8xf32>
    "tpu.trace_stop"() : () -> ()
    %cst_5 = arith.constant dense<0xFF800000> : vector<4x8xf32>
    %17 = vector.multi_reduction <maximumf>, %16, %cst_5 [2] : vector<4x8x8xf32> to vector<4x8xf32>
    %18 = vector.shape_cast %17 : vector<4x8xf32> to vector<4x8x1xf32>
    %19 = vector.broadcast %18 : vector<4x8x1xf32> to vector<4x8x8xf32>
    %20 = arith.subf %16, %19 : vector<4x8x8xf32>
    %21 = math.exp %20 : vector<4x8x8xf32>
    %cst_6 = arith.constant dense<0.000000e+00> : vector<4x8xf32>
    %22 = vector.multi_reduction <add>, %21, %cst_6 [2] : vector<4x8x8xf32> to vector<4x8xf32>
    %23 = vector.shape_cast %22 : vector<4x8xf32> to vector<4x8x1xf32>
    %24 = tpu.reciprocal %23 {approx = true} : vector<4x8x1xf32> -> vector<4x8x1xf32>
    %25 = vector.broadcast %24 : vector<4x8x1xf32> to vector<4x8x8xf32>
    %26 = arith.mulf %21, %25 : vector<4x8x8xf32>
    %27 = arith.truncf %26 : vector<4x8x8xf32> to vector<4x8x8xbf16>
    "tpu.trace_start"() <{level = 10 : i32, message = "hqk,hkd->hqd"}> : () -> ()
    %cst_7 = arith.constant dense<0.000000e+00> : vector<4x8x16xf32>
    %28 = tpu.matmul %27, %15, %cst_7 {dimension_numbers = #tpu.dot_dimension_numbers<[2], [1], [1], [2], [0, 0, 0, 1, 1, 2], [0], [0]>} : vector<4x8x8xbf16>, vector<4x8x16xbf16>, vector<4x8x16xf32> -> vector<4x8x16xf32>
    "tpu.trace_stop"() : () -> ()
    %29 = tpu.transpose %28, [1, 0, 2] : vector<4x8x16xf32> -> vector<8x4x16xf32>
    %30 = vector.shape_cast %29 : vector<8x4x16xf32> to vector<8x64xf32>
    %31 = arith.truncf %30 : vector<8x64xf32> to vector<8x64xbf16>
    %c0_8 = arith.constant 0 : index
    %c0_9 = arith.constant 0 : index
    %32 = vector.load %arg3[%c0_8, %c0_9] : memref<64x32xbf16, #tpu.memory_space<vmem>>, vector<64x32xbf16>
    %cst_10 = arith.constant dense<0.000000e+00> : vector<8x32xf32>
    %33 = tpu.matmul %31, %32, %cst_10 {dimension_numbers = #tpu.dot_dimension_numbers<[1], [0], [0], [1], [0, 0, 1, 1], [], []>} : vector<8x64xbf16>, vector<64x32xbf16>, vector<8x32xf32> -> vector<8x32xf32>
    %c0_11 = arith.constant 0 : index
    %c0_12 = arith.constant 0 : index
    %34 = vector.load %arg4[%c0_11, %c0_12] : memref<1x32xf32, #tpu.memory_space<vmem>>, vector<1x32xf32>
    %35 = vector.broadcast %34 : vector<1x32xf32> to vector<8x32xf32>
    %36 = arith.addf %33, %35 : vector<8x32xf32>
    %c0_13 = arith.constant 0 : index
    %c0_14 = arith.constant 0 : index
    %c0_15 = arith.constant 0 : index
    %37 = vector.load %arg5[%c0_13, %c0_14, %c0_15] : memref<1x8x32xf32, #tpu.memory_space<vmem>>, vector<1x8x32xf32>
    %38 = vector.shape_cast %37 : vector<1x8x32xf32> to vector<8x32xf32>
    %39 = vector.shape_cast %36 : vector<8x32xf32> to vector<1x8x32xf32>
    tpu.vector_store %arg5[%c0_13, %c0_14, %c0_15], %39 {strides = array<i32>} : memref<1x8x32xf32, #tpu.memory_space<vmem>>, vector<1x8x32xf32>,
    return
  }
  func.func @transform_0(%arg0: i32) -> (i32, i32, i32) {
    %c0_i32 = arith.constant 0 : i32
    %c0_i32_0 = arith.constant 0 : i32
    %c0_i32_1 = arith.constant 0 : i32
    return %arg0, %c0_i32, %c0_i32_0 : i32, i32, i32
  }
  func.func @transform_1(%arg0: i32) -> (i32, i32) {
    %c0_i32 = arith.constant 0 : i32
    %c0_i32_0 = arith.constant 0 : i32
    %c0_i32_1 = arith.constant 0 : i32
    return %c0_i32, %c0_i32_0 : i32, i32
  }
  func.func @transform_2(%arg0: i32) -> (i32, i32) {
    %c0_i32 = arith.constant 0 : i32
    %c0_i32_0 = arith.constant 0 : i32
    %c0_i32_1 = arith.constant 0 : i32
    return %c0_i32, %c0_i32_0 : i32, i32
  }
  func.func @transform_3(%arg0: i32) -> (i32, i32) {
    %c0_i32 = arith.constant 0 : i32
    %c0_i32_0 = arith.constant 0 : i32
    %c0_i32_1 = arith.constant 0 : i32
    return %c0_i32, %c0_i32_0 : i32, i32
  }
  func.func @transform_4(%arg0: i32) -> (i32, i32, i32) {
    %c0_i32 = arith.constant 0 : i32
    %c0_i32_0 = arith.constant 0 : i32
    %c0_i32_1 = arith.constant 0 : i32
    return %arg0, %c0_i32, %c0_i32_0 : i32, i32, i32
  }
}

</mosaic_0001>

<llo_original>
// kernel: tpu_custom_call.1
$region0: #{tpu_custom_call.1}
  #allocation0 [shape = 'u32[]', space=smem, size = 0x4, offset = 0x4, fixed_abs, tag = 'smem constant byte address 0x4 - core index']
  #allocation1 [shape = 'u32[144,128]{1,0:T(1,128)}', space=vmem, size = 0x12000, scoped, tag = 'internal scratch']
  %s0 = inlined_call_operand.vmem [shape: bf16[2,8,32], index: 0, kind: input, shape index: {}]
  %s1 = inlined_call_operand.vmem [shape: bf16[32,192], index: 1, kind: input, shape index: {}]
  %s2 = inlined_call_operand.vmem [shape: bf16[64,32], index: 2, kind: input, shape index: {}]
  %s3 = inlined_call_operand.vmem [shape: f32[1,32], index: 3, kind: input, shape index: {}]
  %s4 = inlined_call_operand.hbm [shape: f32[2,8,32], index: 4, kind: output, shape index: {}]
  %s5 = sld [smem:[#allocation0]]
  $region49: #{tpu_custom_call.1} parent=0
    _
  %s7 = ssub.s32 1, %s5
  %s8 = scalar_select 0, %s7, %s5
  $region1: #{tpu_custom_call.1} parent=0
    #allocation2 [shape = 'u8[8192]{0}', space=vmem, size = 0x2000, scoped, tag = 'output window, operand 0']
    #allocation3 [shape = 's32[2]{0}', space=sflag, size = 0x8, scoped, tag = 'scoped memory for tpu_custom_call.1']
    %9 = vsyncpa [#allocation3], 0
    %s10 = scalar_lea.sflag [#allocation3], 1
    %11 = vsyncpa %s10, 0
    loop: start=0, step=1, limit=4
    $region2: #{tpu_custom_call.1} parent=1 // loop_pre_header
      _
    $region3: #{tpu_custom_call.1} parent=1 // loop_header
      %s13 = sphi 0, %s17
      %p14 = scmp.ge.s32.totalorder %s13, 4
      %s23 = sphi 0, %s25
      %s26 = sphi 0, %s23
      %s27 = sphi 0, %s26
      %s43 = sphi 0, %s27
      %s47 = sphi 0, %s47
      %s49 = sphi 0, %s47
      %s50 = sphi 0, %s49
      %s64 = sphi 0, %s50
      %s68 = sphi 0, %s68
      %s70 = sphi 0, %s68
      %s71 = sphi 0, %s70
      %s85 = sphi 0, %s71
      %s89 = sphi 0, %s89
      %s91 = sphi 0, %s89
      %s92 = sphi 0, %s91
      %s106 = sphi 0, %s92
      %s112 = sphi 0, %s114
      %s115 = sphi 0, %s112
      %s116 = sphi 0, %s115
      %s132 = sphi 0, %s116
    $region4: #{tpu_custom_call.1} parent=1 // loop_header_branch
      %16 = sbr.rel (%p14) target = $region8
    $region5: #{tpu_custom_call.1} parent=1 // loop_body
      %s18 = ssub.s32 %s13, 1
      %s19 = ssub.s32 %s13, 2
      %s20 = sadd.s32 %s13, 1
      %s21 = ssub.s32 %s13, %s20
      %p22 = scmp.eq.s32.totalorder %s21, 0
      %s24 = sadd.s32 %s23, 1
      %s25 = scalar_select %p22, %s23, %s24
      %p28 = pneg %p22
      %p29 = scmp.eq.s32.totalorder %s13, 1
      %p30 = por %p28, %p29
      %p31 = scmp.ne.s32.totalorder %s23, %s26
      %p32 = scmp.eq.s32.totalorder %s13, 0
      %p33 = por %p31, %p32
      %p34 = scmp.ne.s32.totalorder %s23, %s26
      %p35 = scmp.eq.s32.totalorder %s18, 1
      %p36 = por %p34, %p35
      %p37 = scmp.ne.s32.totalorder %s26, %s27
      %p38 = scmp.eq.s32.totalorder %s18, 0
      %p39 = por %p37, %p38
      %p40 = scmp.ne.s32.totalorder %s26, %s27
      %p41 = scmp.eq.s32.totalorder %s19, 1
      %p42 = por %p40, %p41
      %p44 = scmp.ne.s32.totalorder %s27, %s43
      %p45 = scmp.eq.s32.totalorder %s19, 0
      %p46 = por %p44, %p45
      %s48 = sadd.s32 %s47, 1
      %p51 = scmp.eq.s32.totalorder %s13, 1
      %p52 = scmp.ne.s32.totalorder %s47, %s49
      %p53 = scmp.eq.s32.totalorder %s13, 0
      %p54 = por %p52, %p53
      %p55 = scmp.ne.s32.totalorder %s47, %s49
      %p56 = scmp.eq.s32.totalorder %s18, 1
      %p57 = por %p55, %p56
      %p58 = scmp.ne.s32.totalorder %s49, %s50
      %p59 = scmp.eq.s32.totalorder %s18, 0
      %p60 = por %p58, %p59
      %p61 = scmp.ne.s32.totalorder %s49, %s50
      %p62 = scmp.eq.s32.totalorder %s19, 1
      %p63 = por %p61, %p62
      %p65 = scmp.ne.s32.totalorder %s50, %s64
      %p66 = scmp.eq.s32.totalorder %s19, 0
      %p67 = por %p65, %p66
      %s69 = sadd.s32 %s68, 1
      %p72 = scmp.eq.s32.totalorder %s13, 1
      %p73 = scmp.ne.s32.totalorder %s68, %s70
      %p74 = scmp.eq.s32.totalorder %s13, 0
      %p75 = por %p73, %p74
      %p76 = scmp.ne.s32.totalorder %s68, %s70
      %p77 = scmp.eq.s32.totalorder %s18, 1
      %p78 = por %p76, %p77
      %p79 = scmp.ne.s32.totalorder %s70, %s71
      %p80 = scmp.eq.s32.totalorder %s18, 0
      %p81 = por %p79, %p80
      %p82 = scmp.ne.s32.totalorder %s70, %s71
      %p83 = scmp.eq.s32.totalorder %s19, 1
      %p84 = por %p82, %p83
      %p86 = scmp.ne.s32.totalorder %s71, %s85
      %p87 = scmp.eq.s32.totalorder %s19, 0
      %p88 = por %p86, %p87
      %s90 = sadd.s32 %s89, 1
      %p93 = scmp.eq.s32.totalorder %s13, 1
      %p94 = scmp.ne.s32.totalorder %s89, %s91
      %p95 = scmp.eq.s32.totalorder %s13, 0
      %p96 = por %p94, %p95
      %p97 = scmp.ne.s32.totalorder %s89, %s91
      %p98 = scmp.eq.s32.totalorder %s18, 1
      %p99 = por %p97, %p98
      %p100 = scmp.ne.s32.totalorder %s91, %s92
      %p101 = scmp.eq.s32.totalorder %s18, 0
      %p102 = por %p100, %p101
      %p103 = scmp.ne.s32.totalorder %s91, %s92
      %p104 = scmp.eq.s32.totalorder %s19, 1
      %p105 = por %p103, %p104
      %p107 = scmp.ne.s32.totalorder %s92, %s106
      %p108 = scmp.eq.s32.totalorder %s19, 0
      %p109 = por %p107, %p108
      %s110 = ssub.s32 %s13, %s20
      %p111 = scmp.eq.s32.totalorder %s110, 0
      %s113 = sadd.s32 %s112, 1
      %s114 = scalar_select %p111, %s112, %s113
      %p117 = pneg %p111
      %p118 = scmp.eq.s32.totalorder %s13, 1
      %p119 = por %p117, %p118
      %p120 = scmp.ne.s32.totalorder %s112, %s115
      %p121 = scmp.eq.s32.totalorder %s13, 0
      %p122 = por %p120, %p121
      %p123 = scmp.ne.s32.totalorder %s112, %s115
      %p124 = scmp.eq.s32.totalorder %s18, 1
      %p125 = por %p123, %p124
      %p126 = scmp.ne.s32.totalorder %s115, %s116
      %p127 = scmp.eq.s32.totalorder %s18, 0
      %p128 = por %p126, %p127
      %p129 = scmp.ne.s32.totalorder %s115, %s116
      %p130 = scmp.eq.s32.totalorder %s19, 1
      %p131 = por %p129, %p130
      %p133 = scmp.ne.s32.totalorder %s116, %s132
      %p134 = scmp.eq.s32.totalorder %s19, 0
      %p135 = por %p133, %p134
      %p136 = scmp.le.s32.totalorder 1, %s13
      %p137 = scmp.lt.s32.totalorder %s13, 3
      %p138 = pnand %p136, %p137
      %p139 = pneg %p138
      // Predicated region
      $region9: #{tpu_custom_call.1} parent=5 // pred_check
        _
      $region10: #{tpu_custom_call.1} parent=5 // pred_check_branch
        %141 = sbr.rel (%p138) target = $region12
      $region11: #{tpu_custom_call.1} parent=5 // pred_region
        %s142 = ssub.s32 %s13, 1
        // Predicated region
        $region13: #{tpu_custom_call.1} parent=11 // pred_check
          %p143 = pneg %p60
        $region14: #{tpu_custom_call.1} parent=11 // pred_check_branch
          %145 = sbr.rel (%p143) target = $region16
        $region15: #{tpu_custom_call.1} parent=11 // pred_region
          _
        $region16: #{tpu_custom_call.1} parent=11 // pred_fallthru
          _
        // Predicated region
        $region17: #{tpu_custom_call.1} parent=11 // pred_check
          %p146 = pneg %p81
        $region18: #{tpu_custom_call.1} parent=11 // pred_check_branch
          %148 = sbr.rel (%p146) target = $region20
        $region19: #{tpu_custom_call.1} parent=11 // pred_region
          _
        $region20: #{tpu_custom_call.1} parent=11 // pred_fallthru
          _
        // Predicated region
        $region21: #{tpu_custom_call.1} parent=11 // pred_check
          %p149 = pneg %p102
        $region22: #{tpu_custom_call.1} parent=11 // pred_check_branch
          %151 = sbr.rel (%p149) target = $region24
        $region23: #{tpu_custom_call.1} parent=11 // pred_region
          _
        $region24: #{tpu_custom_call.1} parent=11 // pred_fallthru
          _
      $region12: #{tpu_custom_call.1} parent=5 // pred_fallthru
        _
      %p152 = scmp.lt.s32.totalorder %s13, 2
      // Predicated region
      $region25: #{tpu_custom_call.1} parent=5 // pred_check
        %p153 = pneg %p152
      $region26: #{tpu_custom_call.1} parent=5 // pred_check_branch
        %155 = sbr.rel (%p153) target = $region28
      $region27: #{tpu_custom_call.1} parent=5 // pred_region
        // Predicated region
        $region29: #{tpu_custom_call.1} parent=27 // pred_check
          %p156 = pneg %p33
        $region30: #{tpu_custom_call.1} parent=27 // pred_check_branch
          %158 = sbr.rel (%p156) target = $region32
        $region31: #{tpu_custom_call.1} parent=27 // pred_region
          %p159 = scmp.lt.s32.totalorder %s13, 1
          %s160 = scalar_select %p159, %s13, 1
          %s161 = smul.addr %s160, 4
          %s162 = scalar_lea.vmem %s0, %s161
        $region32: #{tpu_custom_call.1} parent=27 // pred_fallthru
          _
      $region28: #{tpu_custom_call.1} parent=5 // pred_fallthru
        _
      %p163 = scmp.le.s32.totalorder 1, %s13
      %p164 = scmp.lt.s32.totalorder %s13, 3
      %p165 = pnand %p163, %p164
      %p166 = pneg %p165
      // Predicated region
      $region33: #{tpu_custom_call.1} parent=5 // pred_check
        _
      $region34: #{tpu_custom_call.1} parent=5 // pred_check_branch
        %168 = sbr.rel (%p165) target = $region36
      $region35: #{tpu_custom_call.1} parent=5 // pred_region
        %s169 = ssub.s32 %s13, 1
        %p170 = scmp.lt.s32.totalorder %s18, 1
        %s171 = scalar_select %p170, %s18, 1
        %s172 = smul.addr %s171, 4
        %s173 = scalar_lea.vmem %s0, %s172
        %p174 = pneg %p39
        %p175 = pneg %p36
        %p176 = pneg %p60
        %p177 = pneg %p57
        %p178 = pneg %p81
        %p179 = pneg %p78
        %p180 = pneg %p102
        %p181 = pneg %p99
        %p182 = pneg %p128
        %p183 = pneg %p125
        %s184 = sand.u32 %s115, 1
        %s185 = scalar_lea.sflag [#allocation3], %s184
        %s186 = sand.u32 %s115, 1
        %s187 = smul.addr %s186, 8
        %s188 = scalar_lea.vmem [#allocation2], %s187
        %p189 = scmp.lt.s32.totalorder %s18, 1
        %s190 = scalar_select %p189, %s18, 1
        %s191 = smul.addr %s190, 4
        %s192 = scalar_lea.vmem %s0, %s191
        %v194 = vld [vmem:[%s192] sm:$0xf]
        %v195 = vld [vmem:[%s1] sm:$0xff]
        %v196 = vld [vmem:[%s1 + $0x8] sm:$0xff]
        %v197 = vld [vmem:[%s1 + $0x10] sm:$0xff]
        %v198 = vld [vmem:[%s1 + $0x18] sm:$0xff]
        %v203 = vunpack.c.l.b16 %v195
        %v204 = vunpack.c.h.b16 %v195
        %v205 = vunpack.c.l.b16 %v196
        %v206 = vunpack.c.h.b16 %v196
        %v207 = vunpack.c.l.b16 %v197
        %v208 = vunpack.c.h.b16 %v197
        %v209 = vunpack.c.l.b16 %v198
        %v210 = vunpack.c.h.b16 %v198
        %v211 = vpack.c.b16 %v205, %v203
        %v212 = vpack.c.b16 %v206, %v204
        %v213 = vpack.c.b16 %v209, %v207
        %v214 = vpack.c.b16 %v210, %v208
        %vm219 = vcmask 261120
        %v221 = vsel %vm219, %v194, 0
        %223 = vmatprep.subr.bf16.mxu0 0
        %224 = vmatpush1.bf16.msra.mxu0 0
        %225 = vmatprep.subr.bf16.mxu0 0
        %226 = vmatpush1.bf16.msra.mxu0 0
        %227 = vmatprep.subr.bf16.mxu0 0
        %228 = vmatpush1.bf16.msra.mxu0 0
        %229 = vmatprep.subr.bf16.mxu0 0
        %230 = vmatpush1.bf16.msra.mxu0 0
        %231 = vmatprep.subr.bf16.mxu0 0
        %232 = vmatpush1.bf16.msra.mxu0 0
        %233 = vmatprep.subr.bf16.mxu0 0
        %234 = vmatpush1.bf16.msra.mxu0 0
        %235 = vmatprep.subr.bf16.mxu0 %v214
        %236 = vmatpush1.bf16.msra.mxu0 %v213
        %237 = vmatprep.subr.bf16.mxu0 %v212
        %238 = vmatpush1.bf16.msra.mxu0 %v211
        %239 = vmatprep.subr.bf16.mxu0 0
        %240 = vmatpush2.bf16.msra.mxu0 0
        %241 = vmatprep.subr.bf16.mxu0 0
        %242 = vmatpush2.bf16.msra.mxu0 0
        %243 = vmatprep.subr.bf16.mxu0 0
        %244 = vmatpush2.bf16.msra.mxu0 0
        %245 = vmatprep.subr.bf16.mxu0 0
        %246 = vmatpush2.bf16.msra.mxu0 0
        %247 = vmatprep.subr.bf16.mxu0 0
        %248 = vmatpush2.bf16.msra.mxu0 0
        %249 = vmatprep.subr.bf16.mxu0 0
        %250 = vmatpush2.bf16.msra.mxu0 0
        %251 = vmatprep.subr.bf16.mxu0 0
        %252 = vmatpush2.bf16.msra.mxu0 0
        %253 = vmatprep.subr.bf16.mxu0 0
        %254 = vmatpush2.bf16.msra.mxu0 0
        %255 = vmatprep.mubr.bf16.mxu0 0
        %256 = vmatmul.mubr.bf16.gmra.mxu0 %v221
        %v257 = vpop.f32.mrf.mxu0
        %v258 = vadd.f32 0.0, %v257
        %v259 = vpop.f32.mrf.mxu0
        %v260 = vadd.f32 0.0, %v259
        %v261 = vpop.f32.mrf.mxu0
        %v262 = vpop.f32.mrf.mxu0
        %263 = vdwg.mxu0
        %265 = vrot.lane.b32.xlu0 %v258, 112
        %v266 = vpop.permute.xlu0 %265
        %268 = vrot.lane.b32.xlu0 %v258, 96
        %v269 = vpop.permute.xlu0 %268
        %271 = vrot.lane.b32.xlu0 %v258, 80
        %v272 = vpop.permute.xlu0 %271
        %v274 = vcombine.low %v258, %v269
        %v275 = vcombine.high %v258, %v269
        %v277 = vunpack.c.l.s4 1983009808
        %v278 = vunpack.c.0.s8 %v277
        %v279 = vlaneseq
        %v280 = vshrl.u32 %v279, 7
        %v281 = vsub.s32 %v278, %v280
        %v282 = vrot.slane %v274, %v281
        %v284 = vunpack.c.l.s4 1983009808
        %v285 = vunpack.c.0.s8 %v284
        %v286 = vlaneseq
        %v287 = vshrl.u32 %v286, 7
        %v288 = vsub.s32 %v285, %v287
        %v289 = vrot.slane %v275, %v288
        %v290 = vcombine.low %v266, %v272
        %v291 = vcombine.high %v266, %v272
        %v293 = vunpack.c.l.s4 1983009808
        %v294 = vunpack.c.0.s8 %v293
        %v295 = vlaneseq
        %v296 = vshrl.u32 %v295, 7
        %v297 = vsub.s32 %v294, %v296
        %v298 = vrot.slane %v290, %v297
        %v300 = vunpack.c.l.s4 1983009808
        %v301 = vunpack.c.0.s8 %v300
        %v302 = vlaneseq
        %v303 = vshrl.u32 %v302, 7
        %v304 = vsub.s32 %v301, %v303
        %v305 = vrot.slane %v291, %v304
        %v306 = vcombine.low %v282, %v298
        %v307 = vcombine.high %v282, %v298
        %v309 = vunpack.c.l.s4 1934713408
        %v310 = vunpack.c.0.s8 %v309
        %v311 = vlaneseq
        %v312 = vshrl.u32 %v311, 7
        %v313 = vsub.s32 %v310, %v312
        %v314 = vrot.slane %v306, %v313
        %v316 = vunpack.c.l.s4 1934713408
        %v317 = vunpack.c.0.s8 %v316
        %v318 = vlaneseq
        %v319 = vshrl.u32 %v318, 7
        %v320 = vsub.s32 %v317, %v319
        %v321 = vrot.slane %v307, %v320
        %v322 = vcombine.low %v289, %v305
        %v323 = vcombine.high %v289, %v305
        %v325 = vunpack.c.l.s4 1934713408
        %v326 = vunpack.c.0.s8 %v325
        %v327 = vlaneseq
        %v328 = vshrl.u32 %v327, 7
        %v329 = vsub.s32 %v326, %v328
        %v330 = vrot.slane %v322, %v329
        %v332 = vunpack.c.l.s4 1934713408
        %v333 = vunpack.c.0.s8 %v332
        %v334 = vlaneseq
        %v335 = vshrl.u32 %v334, 7
        %v336 = vsub.s32 %v333, %v335
        %v337 = vrot.slane %v323, %v336
        %v338 = vcombine.high %v314, 0.0
        %v339 = vcombine.high %v321, 0.0
        %v340 = vcombine.high %v330, 0.0
        %v341 = vcombine.high %v337, 0.0
        %v342 = vcombine.low %v314, %v321
        %v344 = vunpack.c.l.s4 1983009808
        %v345 = vunpack.c.0.s8 %v344
        %v346 = vlaneseq
        %v347 = vshrl.u32 %v346, 7
        %v348 = vsub.s32 %v345, %v347
        %v349 = vrot.slane %v342, %v348
        %v350 = vcombine.low %v338, %v339
        %v352 = vunpack.c.l.s4 1983009808
        %v353 = vunpack.c.0.s8 %v352
        %v354 = vlaneseq
        %v355 = vshrl.u32 %v354, 7
        %v356 = vsub.s32 %v353, %v355
        %v357 = vrot.slane %v350, %v356
        %v358 = vcombine.low %v330, %v337
        %v360 = vunpack.c.l.s4 1983009808
        %v361 = vunpack.c.0.s8 %v360
        %v362 = vlaneseq
        %v363 = vshrl.u32 %v362, 7
        %v364 = vsub.s32 %v361, %v363
        %v365 = vrot.slane %v358, %v364
        %v366 = vcombine.low %v340, %v341
        %v368 = vunpack.c.l.s4 1983009808
        %v369 = vunpack.c.0.s8 %v368
        %v370 = vlaneseq
        %v371 = vshrl.u32 %v370, 7
        %v372 = vsub.s32 %v369, %v371
        %v373 = vrot.slane %v366, %v372
        %v374 = vcombine.low %v349, %v357
        %v375 = vcombine.high %v349, %v357
        %v377 = vunpack.c.l.s4 1934713408
        %v378 = vunpack.c.0.s8 %v377
        %v379 = vlaneseq
        %v380 = vshrl.u32 %v379, 7
        %v381 = vsub.s32 %v378, %v380
        %v382 = vrot.slane %v374, %v381
        %v384 = vunpack.c.l.s4 1934713408
        %v385 = vunpack.c.0.s8 %v384
        %v386 = vlaneseq
        %v387 = vshrl.u32 %v386, 7
        %v388 = vsub.s32 %v385, %v387
        %v389 = vrot.slane %v375, %v388
        %v390 = vcombine.low %v365, %v373
        %v391 = vcombine.high %v365, %v373
        %v393 = vunpack.c.l.s4 1934713408
        %v394 = vunpack.c.0.s8 %v393
        %v395 = vlaneseq
        %v396 = vshrl.u32 %v395, 7
        %v397 = vsub.s32 %v394, %v396
        %v398 = vrot.slane %v390, %v397
        %v400 = vunpack.c.l.s4 1934713408
        %v401 = vunpack.c.0.s8 %v400
        %v402 = vlaneseq
        %v403 = vshrl.u32 %v402, 7
        %v404 = vsub.s32 %v401, %v403
        %v405 = vrot.slane %v391, %v404
        %v406 = vcombine.low %v382, %v398
        %v407 = vcombine.high %v382, %v398
        %v408 = vcombine.low %v389, %v405
        %v409 = vcombine.high %v389, %v405
        %v410 = vpack.c.bf16 %v406, %v406
        %v411 = vpack.c.bf16 %v407, %v407
        %v412 = vpack.c.bf16 %v408, %v408
        %v413 = vpack.c.bf16 %v409, %v409
        %414 = vrot.lane.b32.xlu0 %v258, 64
        %v415 = vpop.permute.xlu0 %414
        %416 = vrot.lane.b32.xlu0 %v266, 64
        %v417 = vpop.permute.xlu0 %416
        %418 = vrot.lane.b32.xlu0 %v269, 64
        %v419 = vpop.permute.xlu0 %418
        %420 = vrot.lane.b32.xlu0 %v272, 64
        %v421 = vpop.permute.xlu0 %420
        %v426 = vcombine.low %v415, %v419
        %v427 = vcombine.high %v415, %v419
        %v429 = vunpack.c.l.s4 1983009808
        %v430 = vunpack.c.0.s8 %v429
        %v431 = vlaneseq
        %v432 = vshrl.u32 %v431, 7
        %v433 = vsub.s32 %v430, %v432
        %v434 = vrot.slane %v426, %v433
        %v436 = vunpack.c.l.s4 1983009808
        %v437 = vunpack.c.0.s8 %v436
        %v438 = vlaneseq
        %v439 = vshrl.u32 %v438, 7
        %v440 = vsub.s32 %v437, %v439
        %v441 = vrot.slane %v427, %v440
        %v442 = vcombine.low %v417, %v421
        %v443 = vcombine.high %v417, %v421
        %v445 = vunpack.c.l.s4 1983009808
        %v446 = vunpack.c.0.s8 %v445
        %v447 = vlaneseq
        %v448 = vshrl.u32 %v447, 7
        %v449 = vsub.s32 %v446, %v448
        %v450 = vrot.slane %v442, %v449
        %v452 = vunpack.c.l.s4 1983009808
        %v453 = vunpack.c.0.s8 %v452
        %v454 = vlaneseq
        %v455 = vshrl.u32 %v454, 7
        %v456 = vsub.s32 %v453, %v455
        %v457 = vrot.slane %v443, %v456
        %v458 = vcombine.low %v434, %v450
        %v459 = vcombine.high %v434, %v450
        %v461 = vunpack.c.l.s4 1934713408
        %v462 = vunpack.c.0.s8 %v461
        %v463 = vlaneseq
        %v464 = vshrl.u32 %v463, 7
        %v465 = vsub.s32 %v462, %v464
        %v466 = vrot.slane %v458, %v465
        %v468 = vunpack.c.l.s4 1934713408
        %v469 = vunpack.c.0.s8 %v468
        %v470 = vlaneseq
        %v471 = vshrl.u32 %v470, 7
        %v472 = vsub.s32 %v469, %v471
        %v473 = vrot.slane %v459, %v472
        %v474 = vcombine.low %v441, %v457
        %v475 = vcombine.high %v441, %v457
        %v477 = vunpack.c.l.s4 1934713408
        %v478 = vunpack.c.0.s8 %v477
        %v479 = vlaneseq
        %v480 = vshrl.u32 %v479, 7
        %v481 = vsub.s32 %v478, %v480
        %v482 = vrot.slane %v474, %v481
        %v484 = vunpack.c.l.s4 1934713408
        %v485 = vunpack.c.0.s8 %v484
        %v486 = vlaneseq
        %v487 = vshrl.u32 %v486, 7
        %v488 = vsub.s32 %v485, %v487
        %v489 = vrot.slane %v475, %v488
        %v490 = vcombine.high %v466, 0.0
        %v491 = vcombine.high %v473, 0.0
        %v492 = vcombine.high %v482, 0.0
        %v493 = vcombine.high %v489, 0.0
        %v494 = vcombine.low %v466, %v473
        %v496 = vunpack.c.l.s4 1983009808
        %v497 = vunpack.c.0.s8 %v496
        %v498 = vlaneseq
        %v499 = vshrl.u32 %v498, 7
        %v500 = vsub.s32 %v497, %v499
        %v501 = vrot.slane %v494, %v500
        %v502 = vcombine.low %v490, %v491
        %v504 = vunpack.c.l.s4 1983009808
        %v505 = vunpack.c.0.s8 %v504
        %v506 = vlaneseq
        %v507 = vshrl.u32 %v506, 7
        %v508 = vsub.s32 %v505, %v507
        %v509 = vrot.slane %v502, %v508
        %v510 = vcombine.low %v482, %v489
        %v512 = vunpack.c.l.s4 1983009808
        %v513 = vunpack.c.0.s8 %v512
        %v514 = vlaneseq
        %v515 = vshrl.u32 %v514, 7
        %v516 = vsub.s32 %v513, %v515
        %v517 = vrot.slane %v510, %v516
        %v518 = vcombine.low %v492, %v493
        %v520 = vunpack.c.l.s4 1983009808
        %v521 = vunpack.c.0.s8 %v520
        %v522 = vlaneseq
        %v523 = vshrl.u32 %v522, 7
        %v524 = vsub.s32 %v521, %v523
        %v525 = vrot.slane %v518, %v524
        %v526 = vcombine.low %v501, %v509
        %v527 = vcombine.high %v501, %v509
        %v529 = vunpack.c.l.s4 1934713408
        %v530 = vunpack.c.0.s8 %v529
        %v531 = vlaneseq
        %v532 = vshrl.u32 %v531, 7
        %v533 = vsub.s32 %v530, %v532
        %v534 = vrot.slane %v526, %v533
        %v536 = vunpack.c.l.s4 1934713408
        %v537 = vunpack.c.0.s8 %v536
        %v538 = vlaneseq
        %v539 = vshrl.u32 %v538, 7
        %v540 = vsub.s32 %v537, %v539
        %v541 = vrot.slane %v527, %v540
        %v542 = vcombine.low %v517, %v525
        %v543 = vcombine.high %v517, %v525
        %v545 = vunpack.c.l.s4 1934713408
        %v546 = vunpack.c.0.s8 %v545
        %v547 = vlaneseq
        %v548 = vshrl.u32 %v547, 7
        %v549 = vsub.s32 %v546, %v548
        %v550 = vrot.slane %v542, %v549
        %v552 = vunpack.c.l.s4 1934713408
        %v553 = vunpack.c.0.s8 %v552
        %v554 = vlaneseq
        %v555 = vshrl.u32 %v554, 7
        %v556 = vsub.s32 %v553, %v555
        %v557 = vrot.slane %v543, %v556
        %v558 = vcombine.low %v534, %v550
        %v559 = vcombine.high %v534, %v550
        %v560 = vcombine.low %v541, %v557
        %v561 = vcombine.high %v541, %v557
        %v562 = vpack.c.bf16 %v558, %v558
        %v563 = vpack.c.bf16 %v559, %v559
        %v564 = vpack.c.bf16 %v560, %v560
        %v565 = vpack.c.bf16 %v561, %v561
        %567 = vrot.lane.b32.xlu0 %v260, 112
        %v568 = vpop.permute.xlu0 %567
        %570 = vrot.lane.b32.xlu0 %v260, 96
        %v571 = vpop.permute.xlu0 %570
        %573 = vrot.lane.b32.xlu0 %v260, 80
        %v574 = vpop.permute.xlu0 %573
        %v576 = vcombine.low %v260, %v571
        %v577 = vcombine.high %v260, %v571
        %v579 = vunpack.c.l.s4 1983009808
        %v580 = vunpack.c.0.s8 %v579
        %v581 = vlaneseq
        %v582 = vshrl.u32 %v581, 7
        %v583 = vsub.s32 %v580, %v582
        %v584 = vrot.slane %v576, %v583
        %v586 = vunpack.c.l.s4 1983009808
        %v587 = vunpack.c.0.s8 %v586
        %v588 = vlaneseq
        %v589 = vshrl.u32 %v588, 7
        %v590 = vsub.s32 %v587, %v589
        %v591 = vrot.slane %v577, %v590
        %v592 = vcombine.low %v568, %v574
        %v593 = vcombine.high %v568, %v574
        %v595 = vunpack.c.l.s4 1983009808
        %v596 = vunpack.c.0.s8 %v595
        %v597 = vlaneseq
        %v598 = vshrl.u32 %v597, 7
        %v599 = vsub.s32 %v596, %v598
        %v600 = vrot.slane %v592, %v599
        %v602 = vunpack.c.l.s4 1983009808
        %v603 = vunpack.c.0.s8 %v602
        %v604 = vlaneseq
        %v605 = vshrl.u32 %v604, 7
        %v606 = vsub.s32 %v603, %v605
        %v607 = vrot.slane %v593, %v606
        %v608 = vcombine.low %v584, %v600
        %v609 = vcombine.high %v584, %v600
        %v611 = vunpack.c.l.s4 1934713408
        %v612 = vunpack.c.0.s8 %v611
        %v613 = vlaneseq
        %v614 = vshrl.u32 %v613, 7
        %v615 = vsub.s32 %v612, %v614
        %v616 = vrot.slane %v608, %v615
        %v618 = vunpack.c.l.s4 1934713408
        %v619 = vunpack.c.0.s8 %v618
        %v620 = vlaneseq
        %v621 = vshrl.u32 %v620, 7
        %v622 = vsub.s32 %v619, %v621
        %v623 = vrot.slane %v609, %v622
        %v624 = vcombine.low %v591, %v607
        %v625 = vcombine.high %v591, %v607
        %v627 = vunpack.c.l.s4 1934713408
        %v628 = vunpack.c.0.s8 %v627
        %v629 = vlaneseq
        %v630 = vshrl.u32 %v629, 7
        %v631 = vsub.s32 %v628, %v630
        %v632 = vrot.slane %v624, %v631
        %v634 = vunpack.c.l.s4 1934713408
        %v635 = vunpack.c.0.s8 %v634
        %v636 = vlaneseq
        %v637 = vshrl.u32 %v636, 7
        %v638 = vsub.s32 %v635, %v637
        %v639 = vrot.slane %v625, %v638
        %v640 = vcombine.high %v616, 0.0
        %v641 = vcombine.high %v623, 0.0
        %v642 = vcombine.high %v632, 0.0
        %v643 = vcombine.high %v639, 0.0
        %v644 = vcombine.low %v616, %v623
        %v646 = vunpack.c.l.s4 1983009808
        %v647 = vunpack.c.0.s8 %v646
        %v648 = vlaneseq
        %v649 = vshrl.u32 %v648, 7
        %v650 = vsub.s32 %v647, %v649
        %v651 = vrot.slane %v644, %v650
        %v652 = vcombine.low %v640, %v641
        %v654 = vunpack.c.l.s4 1983009808
        %v655 = vunpack.c.0.s8 %v654
        %v656 = vlaneseq
        %v657 = vshrl.u32 %v656, 7
        %v658 = vsub.s32 %v655, %v657
        %v659 = vrot.slane %v652, %v658
        %v660 = vcombine.low %v632, %v639
        %v662 = vunpack.c.l.s4 1983009808
        %v663 = vunpack.c.0.s8 %v662
        %v664 = vlaneseq
        %v665 = vshrl.u32 %v664, 7
        %v666 = vsub.s32 %v663, %v665
        %v667 = vrot.slane %v660, %v666
        %v668 = vcombine.low %v642, %v643
        %v670 = vunpack.c.l.s4 1983009808
        %v671 = vunpack.c.0.s8 %v670
        %v672 = vlaneseq
        %v673 = vshrl.u32 %v672, 7
        %v674 = vsub.s32 %v671, %v673
        %v675 = vrot.slane %v668, %v674
        %v676 = vcombine.low %v651, %v659
        %v677 = vcombine.high %v651, %v659
        %v679 = vunpack.c.l.s4 1934713408
        %v680 = vunpack.c.0.s8 %v679
        %v681 = vlaneseq
        %v682 = vshrl.u32 %v681, 7
        %v683 = vsub.s32 %v680, %v682
        %v684 = vrot.slane %v676, %v683
        %v686 = vunpack.c.l.s4 1934713408
        %v687 = vunpack.c.0.s8 %v686
        %v688 = vlaneseq
        %v689 = vshrl.u32 %v688, 7
        %v690 = vsub.s32 %v687, %v689
        %v691 = vrot.slane %v677, %v690
        %v692 = vcombine.low %v667, %v675
        %v693 = vcombine.high %v667, %v675
        %v695 = vunpack.c.l.s4 1934713408
        %v696 = vunpack.c.0.s8 %v695
        %v697 = vlaneseq
        %v698 = vshrl.u32 %v697, 7
        %v699 = vsub.s32 %v696, %v698
        %v700 = vrot.slane %v692, %v699
        %v702 = vunpack.c.l.s4 1934713408
        %v703 = vunpack.c.0.s8 %v702
        %v704 = vlaneseq
        %v705 = vshrl.u32 %v704, 7
        %v706 = vsub.s32 %v703, %v705
        %v707 = vrot.slane %v693, %v706
        %v708 = vcombine.low %v684, %v700
        %v709 = vcombine.high %v684, %v700
        %v710 = vcombine.low %v691, %v707
        %v711 = vcombine.high %v691, %v707
        %v712 = vpack.c.bf16 %v708, %v708
        %v713 = vpack.c.bf16 %v709, %v709
        %v714 = vpack.c.bf16 %v710, %v710
        %v715 = vpack.c.bf16 %v711, %v711
        %vm716 = vcmask 130048
        %v718 = vsel %vm716, %v410, 0
        %v721 = vsel %vm716, %v562, 0
        %723 = vmatprep.subr.bf16.mxu0 0
        %724 = vmatpush1.bf16.xpose.msra.mxu0 0
        %725 = vmatprep.subr.bf16.mxu0 0
        %726 = vmatpush1.bf16.xpose.msra.mxu0 0
        %727 = vmatprep.subr.bf16.mxu0 0
        %728 = vmatpush1.bf16.xpose.msra.mxu0 0
        %729 = vmatprep.subr.bf16.mxu0 0
        %730 = vmatpush1.bf16.xpose.msra.mxu0 0
        %731 = vmatprep.subr.bf16.mxu0 0
        %732 = vmatpush1.bf16.xpose.msra.mxu0 0
        %733 = vmatprep.subr.bf16.mxu0 0
        %734 = vmatpush1.bf16.xpose.msra.mxu0 0
        %735 = vmatprep.subr.bf16.mxu0 0
        %736 = vmatpush1.bf16.xpose.msra.mxu0 0
        %737 = vmatprep.subr.bf16.mxu0 0
        %738 = vmatpush1.bf16.xpose.msra.mxu0 %v721
        %739 = vmatprep.subr.bf16.mxu0 0
        %740 = vmatpush2.bf16.xpose.msra.mxu0 0
        %741 = vmatprep.subr.bf16.mxu0 0
        %742 = vmatpush2.bf16.xpose.msra.mxu0 0
        %743 = vmatprep.subr.bf16.mxu0 0
        %744 = vmatpush2.bf16.xpose.msra.mxu0 0
        %745 = vmatprep.subr.bf16.mxu0 0
        %746 = vmatpush2.bf16.xpose.msra.mxu0 0
        %747 = vmatprep.subr.bf16.mxu0 0
        %748 = vmatpush2.bf16.xpose.msra.mxu0 0
        %749 = vmatprep.subr.bf16.mxu0 0
        %750 = vmatpush2.bf16.xpose.msra.mxu0 0
        %751 = vmatprep.subr.bf16.mxu0 0
        %752 = vmatpush2.bf16.xpose.msra.mxu0 0
        %753 = vmatprep.subr.bf16.mxu0 0
        %754 = vmatpush2.bf16.xpose.msra.mxu0 0
        %755 = vmatprep.mubr.bf16.mxu0 0
        %756 = vmatmul.mubr.bf16.gmra.mxu0 %v718
        %v757 = vpop.f32.mrf.mxu0
        %v758 = vadd.f32 0.0, %v757
        %v759 = vpop.f32.mrf.mxu0
        %v760 = vpop.f32.mrf.mxu0
        %v761 = vpop.f32.mrf.mxu0
        %762 = vdwg.mxu0
        %v764 = vsel %vm716, %v411, 0
        %v767 = vsel %vm716, %v563, 0
        %769 = vmatprep.subr.bf16.mxu0 0
        %770 = vmatpush1.bf16.xpose.msra.mxu0 0
        %771 = vmatprep.subr.bf16.mxu0 0
        %772 = vmatpush1.bf16.xpose.msra.mxu0 0
        %773 = vmatprep.subr.bf16.mxu0 0
        %774 = vmatpush1.bf16.xpose.msra.mxu0 0
        %775 = vmatprep.subr.bf16.mxu0 0
        %776 = vmatpush1.bf16.xpose.msra.mxu0 0
        %777 = vmatprep.subr.bf16.mxu0 0
        %778 = vmatpush1.bf16.xpose.msra.mxu0 0
        %779 = vmatprep.subr.bf16.mxu0 0
        %780 = vmatpush1.bf16.xpose.msra.mxu0 0
        %781 = vmatprep.subr.bf16.mxu0 0
        %782 = vmatpush1.bf16.xpose.msra.mxu0 0
        %783 = vmatprep.subr.bf16.mxu0 0
        %784 = vmatpush1.bf16.xpose.msra.mxu0 %v767
        %785 = vmatprep.subr.bf16.mxu0 0
        %786 = vmatpush2.bf16.xpose.msra.mxu0 0
        %787 = vmatprep.subr.bf16.mxu0 0
        %788 = vmatpush2.bf16.xpose.msra.mxu0 0
        %789 = vmatprep.subr.bf16.mxu0 0
        %790 = vmatpush2.bf16.xpose.msra.mxu0 0
        %791 = vmatprep.subr.bf16.mxu0 0
        %792 = vmatpush2.bf16.xpose.msra.mxu0 0
        %793 = vmatprep.subr.bf16.mxu0 0
        %794 = vmatpush2.bf16.xpose.msra.mxu0 0
        %795 = vmatprep.subr.bf16.mxu0 0
        %796 = vmatpush2.bf16.xpose.msra.mxu0 0
        %797 = vmatprep.subr.bf16.mxu0 0
        %798 = vmatpush2.bf16.xpose.msra.mxu0 0
        %799 = vmatprep.subr.bf16.mxu0 0
        %800 = vmatpush2.bf16.xpose.msra.mxu0 0
        %801 = vmatprep.mubr.bf16.mxu0 0
        %802 = vmatmul.mubr.bf16.gmra.mxu0 %v764
        %v803 = vpop.f32.mrf.mxu0
        %v804 = vadd.f32 0.0, %v803
        %v805 = vpop.f32.mrf.mxu0
        %v806 = vpop.f32.mrf.mxu0
        %v807 = vpop.f32.mrf.mxu0
        %808 = vdwg.mxu0
        %v810 = vsel %vm716, %v412, 0
        %v813 = vsel %vm716, %v564, 0
        %815 = vmatprep.subr.bf16.mxu0 0
        %816 = vmatpush1.bf16.xpose.msra.mxu0 0
        %817 = vmatprep.subr.bf16.mxu0 0
        %818 = vmatpush1.bf16.xpose.msra.mxu0 0
        %819 = vmatprep.subr.bf16.mxu0 0
        %820 = vmatpush1.bf16.xpose.msra.mxu0 0
        %821 = vmatprep.subr.bf16.mxu0 0
        %822 = vmatpush1.bf16.xpose.msra.mxu0 0
        %823 = vmatprep.subr.bf16.mxu0 0
        %824 = vmatpush1.bf16.xpose.msra.mxu0 0
        %825 = vmatprep.subr.bf16.mxu0 0
        %826 = vmatpush1.bf16.xpose.msra.mxu0 0
        %827 = vmatprep.subr.bf16.mxu0 0
        %828 = vmatpush1.bf16.xpose.msra.mxu0 0
        %829 = vmatprep.subr.bf16.mxu0 0
        %830 = vmatpush1.bf16.xpose.msra.mxu0 %v813
        %831 = vmatprep.subr.bf16.mxu0 0
        %832 = vmatpush2.bf16.xpose.msra.mxu0 0
        %833 = vmatprep.subr.bf16.mxu0 0
        %834 = vmatpush2.bf16.xpose.msra.mxu0 0
        %835 = vmatprep.subr.bf16.mxu0 0
        %836 = vmatpush2.bf16.xpose.msra.mxu0 0
        %837 = vmatprep.subr.bf16.mxu0 0
        %838 = vmatpush2.bf16.xpose.msra.mxu0 0
        %839 = vmatprep.subr.bf16.mxu0 0
        %840 = vmatpush2.bf16.xpose.msra.mxu0 0
        %841 = vmatprep.subr.bf16.mxu0 0
        %842 = vmatpush2.bf16.xpose.msra.mxu0 0
        %843 = vmatprep.subr.bf16.mxu0 0
        %844 = vmatpush2.bf16.xpose.msra.mxu0 0
        %845 = vmatprep.subr.bf16.mxu0 0
        %846 = vmatpush2.bf16.xpose.msra.mxu0 0
        %847 = vmatprep.mubr.bf16.mxu0 0
        %848 = vmatmul.mubr.bf16.gmra.mxu0 %v810
        %v849 = vpop.f32.mrf.mxu0
        %v850 = vadd.f32 0.0, %v849
        %v851 = vpop.f32.mrf.mxu0
        %v852 = vpop.f32.mrf.mxu0
        %v853 = vpop.f32.mrf.mxu0
        %854 = vdwg.mxu0
        %v856 = vsel %vm716, %v413, 0
        %v859 = vsel %vm716, %v565, 0
        %861 = vmatprep.subr.bf16.mxu0 0
        %862 = vmatpush1.bf16.xpose.msra.mxu0 0
        %863 = vmatprep.subr.bf16.mxu0 0
        %864 = vmatpush1.bf16.xpose.msra.mxu0 0
        %865 = vmatprep.subr.bf16.mxu0 0
        %866 = vmatpush1.bf16.xpose.msra.mxu0 0
        %867 = vmatprep.subr.bf16.mxu0 0
        %868 = vmatpush1.bf16.xpose.msra.mxu0 0
        %869 = vmatprep.subr.bf16.mxu0 0
        %870 = vmatpush1.bf16.xpose.msra.mxu0 0
        %871 = vmatprep.subr.bf16.mxu0 0
        %872 = vmatpush1.bf16.xpose.msra.mxu0 0
        %873 = vmatprep.subr.bf16.mxu0 0
        %874 = vmatpush1.bf16.xpose.msra.mxu0 0
        %875 = vmatprep.subr.bf16.mxu0 0
        %876 = vmatpush1.bf16.xpose.msra.mxu0 %v859
        %877 = vmatprep.subr.bf16.mxu0 0
        %878 = vmatpush2.bf16.xpose.msra.mxu0 0
        %879 = vmatprep.subr.bf16.mxu0 0
        %880 = vmatpush2.bf16.xpose.msra.mxu0 0
        %881 = vmatprep.subr.bf16.mxu0 0
        %882 = vmatpush2.bf16.xpose.msra.mxu0 0
        %883 = vmatprep.subr.bf16.mxu0 0
        %884 = vmatpush2.bf16.xpose.msra.mxu0 0
        %885 = vmatprep.subr.bf16.mxu0 0
        %886 = vmatpush2.bf16.xpose.msra.mxu0 0
        %887 = vmatprep.subr.bf16.mxu0 0
        %888 = vmatpush2.bf16.xpose.msra.mxu0 0
        %889 = vmatprep.subr.bf16.mxu0 0
        %890 = vmatpush2.bf16.xpose.msra.mxu0 0
        %891 = vmatprep.subr.bf16.mxu0 0
        %892 = vmatpush2.bf16.xpose.msra.mxu0 0
        %893 = vmatprep.mubr.bf16.mxu0 0
        %894 = vmatmul.mubr.bf16.gmra.mxu0 %v856
        %v895 = vpop.f32.mrf.mxu0
        %v896 = vadd.f32 0.0, %v895
        %v897 = vpop.f32.mrf.mxu0
        %v898 = vpop.f32.mrf.mxu0
        %v899 = vpop.f32.mrf.mxu0
        %900 = vdwg.mxu0
        %vm901 = vcmask 64512
        %v902 = vsel %vm901, %v758, -inf
        %903 = vmax.xlane.f32.xlu0 %v902
        %v904 = vpop.xlane.xlu0 %903
        %v905 = vsel %vm901, %v804, -inf
        %906 = vmax.xlane.f32.xlu0 %v905
        %v907 = vpop.xlane.xlu0 %906
        %v908 = vsel %vm901, %v850, -inf
        %909 = vmax.xlane.f32.xlu0 %v908
        %v910 = vpop.xlane.xlu0 %909
        %v911 = vsel %vm901, %v896, -inf
        %912 = vmax.xlane.f32.xlu0 %v911
        %v913 = vpop.xlane.xlu0 %912
        %v914 = vsub.f32 %v758, %v904
        %v915 = vsub.f32 %v804, %v907
        %v916 = vsub.f32 %v850, %v910
        %v917 = vsub.f32 %v896, %v913
        %v918 = vmul.f32 %v914, 1.442695
        %v919 = vpow.pop %v918
        %v920 = vmul.f32 %v915, 1.442695
        %v921 = vpow.pop %v920
        %v922 = vmul.f32 %v916, 1.442695
        %v923 = vpow.pop %v922
        %v924 = vmul.f32 %v917, 1.442695
        %v925 = vpow.pop %v924
        %v926 = vsel %vm901, %v919, 0.0
        %927 = vadd.xlane.f32.xlu0 %v926
        %v928 = vpop.xlane.xlu0 %927
        %v929 = vsel %vm901, %v921, 0.0
        %930 = vadd.xlane.f32.xlu0 %v929
        %v931 = vpop.xlane.xlu0 %930
        %v932 = vsel %vm901, %v923, 0.0
        %933 = vadd.xlane.f32.xlu0 %v932
        %v934 = vpop.xlane.xlu0 %933
        %v935 = vsel %vm901, %v925, 0.0
        %936 = vadd.xlane.f32.xlu0 %v935
        %v937 = vpop.xlane.xlu0 %936
        %v938 = vrcp.pop %v928
        %v939 = vrcp.pop %v931
        %v940 = vrcp.pop %v934
        %v941 = vrcp.pop %v937
        %v942 = vmul.f32 %v919, %v938
        %v943 = vmul.f32 %v921, %v939
        %v944 = vmul.f32 %v923, %v940
        %v945 = vmul.f32 %v925, %v941
        %v946 = vpack.c.bf16 %v942, %v942
        %v947 = vpack.c.bf16 %v943, %v943
        %v948 = vpack.c.bf16 %v944, %v944
        %v949 = vpack.c.bf16 %v945, %v945
        %v951 = vsel %vm901, %v946, 0
        %vm953 = vcmask 1043456
        %v955 = vsel %vm953, %v712, 0
        %957 = vmatprep.subr.bf16.mxu0 0
        %958 = vmatpush1.bf16.msra.mxu0 0
        %959 = vmatprep.subr.bf16.mxu0 0
        %960 = vmatpush1.bf16.msra.mxu0 0
        %961 = vmatprep.subr.bf16.mxu0 0
        %962 = vmatpush1.bf16.msra.mxu0 0
        %963 = vmatprep.subr.bf16.mxu0 0
        %964 = vmatpush1.bf16.msra.mxu0 0
        %965 = vmatprep.subr.bf16.mxu0 0
        %966 = vmatpush1.bf16.msra.mxu0 0
        %967 = vmatprep.subr.bf16.mxu0 0
        %968 = vmatpush1.bf16.msra.mxu0 0
        %969 = vmatprep.subr.bf16.mxu0 0
        %970 = vmatpush1.bf16.msra.mxu0 0
        %971 = vmatprep.subr.bf16.mxu0 0
        %972 = vmatpush1.bf16.msra.mxu0 %v955
        %973 = vmatprep.subr.bf16.mxu0 0
        %974 = vmatpush2.bf16.msra.mxu0 0
        %975 = vmatprep.subr.bf16.mxu0 0
        %976 = vmatpush2.bf16.msra.mxu0 0
        %977 = vmatprep.subr.bf16.mxu0 0
        %978 = vmatpush2.bf16.msra.mxu0 0
        %979 = vmatprep.subr.bf16.mxu0 0
        %980 = vmatpush2.bf16.msra.mxu0 0
        %981 = vmatprep.subr.bf16.mxu0 0
        %982 = vmatpush2.bf16.msra.mxu0 0
        %983 = vmatprep.subr.bf16.mxu0 0
        %984 = vmatpush2.bf16.msra.mxu0 0
        %985 = vmatprep.subr.bf16.mxu0 0
        %986 = vmatpush2.bf16.msra.mxu0 0
        %987 = vmatprep.subr.bf16.mxu0 0
        %988 = vmatpush2.bf16.msra.mxu0 0
        %989 = vmatprep.mubr.bf16.mxu0 0
        %990 = vmatmul.mubr.bf16.gmra.mxu0 %v951
        %v991 = vpop.f32.mrf.mxu0
        %v992 = vadd.f32 0.0, %v991
        %v993 = vpop.f32.mrf.mxu0
        %v994 = vpop.f32.mrf.mxu0
        %v995 = vpop.f32.mrf.mxu0
        %996 = vdwg.mxu0
        %v998 = vsel %vm901, %v947, 0
        %v1001 = vsel %vm953, %v713, 0
        %1003 = vmatprep.subr.bf16.mxu0 0
        %1004 = vmatpush1.bf16.msra.mxu0 0
        %1005 = vmatprep.subr.bf16.mxu0 0
        %1006 = vmatpush1.bf16.msra.mxu0 0
        %1007 = vmatprep.subr.bf16.mxu0 0
        %1008 = vmatpush1.bf16.msra.mxu0 0
        %1009 = vmatprep.subr.bf16.mxu0 0
        %1010 = vmatpush1.bf16.msra.mxu0 0
        %1011 = vmatprep.subr.bf16.mxu0 0
        %1012 = vmatpush1.bf16.msra.mxu0 0
        %1013 = vmatprep.subr.bf16.mxu0 0
        %1014 = vmatpush1.bf16.msra.mxu0 0
        %1015 = vmatprep.subr.bf16.mxu0 0
        %1016 = vmatpush1.bf16.msra.mxu0 0
        %1017 = vmatprep.subr.bf16.mxu0 0
        %1018 = vmatpush1.bf16.msra.mxu0 %v1001
        %1019 = vmatprep.subr.bf16.mxu0 0
        %1020 = vmatpush2.bf16.msra.mxu0 0
        %1021 = vmatprep.subr.bf16.mxu0 0
        %1022 = vmatpush2.bf16.msra.mxu0 0
        %1023 = vmatprep.subr.bf16.mxu0 0
        %1024 = vmatpush2.bf16.msra.mxu0 0
        %1025 = vmatprep.subr.bf16.mxu0 0
        %1026 = vmatpush2.bf16.msra.mxu0 0
        %1027 = vmatprep.subr.bf16.mxu0 0
        %1028 = vmatpush2.bf16.msra.mxu0 0
        %1029 = vmatprep.subr.bf16.mxu0 0
        %1030 = vmatpush2.bf16.msra.mxu0 0
        %1031 = vmatprep.subr.bf16.mxu0 0
        %1032 = vmatpush2.bf16.msra.mxu0 0
        %1033 = vmatprep.subr.bf16.mxu0 0
        %1034 = vmatpush2.bf16.msra.mxu0 0
        %1035 = vmatprep.mubr.bf16.mxu0 0
        %1036 = vmatmul.mubr.bf16.gmra.mxu0 %v998
        %v1037 = vpop.f32.mrf.mxu0
        %v1038 = vadd.f32 0.0, %v1037
        %v1039 = vpop.f32.mrf.mxu0
        %v1040 = vpop.f32.mrf.mxu0
        %v1041 = vpop.f32.mrf.mxu0
        %1042 = vdwg.mxu0
        %v1044 = vsel %vm901, %v948, 0
        %v1047 = vsel %vm953, %v714, 0
        %1049 = vmatprep.subr.bf16.mxu0 0
        %1050 = vmatpush1.bf16.msra.mxu0 0
        %1051 = vmatprep.subr.bf16.mxu0 0
        %1052 = vmatpush1.bf16.msra.mxu0 0
        %1053 = vmatprep.subr.bf16.mxu0 0
        %1054 = vmatpush1.bf16.msra.mxu0 0
        %1055 = vmatprep.subr.bf16.mxu0 0
        %1056 = vmatpush1.bf16.msra.mxu0 0
        %1057 = vmatprep.subr.bf16.mxu0 0
        %1058 = vmatpush1.bf16.msra.mxu0 0
        %1059 = vmatprep.subr.bf16.mxu0 0
        %1060 = vmatpush1.bf16.msra.mxu0 0
        %1061 = vmatprep.subr.bf16.mxu0 0
        %1062 = vmatpush1.bf16.msra.mxu0 0
        %1063 = vmatprep.subr.bf16.mxu0 0
        %1064 = vmatpush1.bf16.msra.mxu0 %v1047
        %1065 = vmatprep.subr.bf16.mxu0 0
        %1066 = vmatpush2.bf16.msra.mxu0 0
        %1067 = vmatprep.subr.bf16.mxu0 0
        %1068 = vmatpush2.bf16.msra.mxu0 0
        %1069 = vmatprep.subr.bf16.mxu0 0
        %1070 = vmatpush2.bf16.msra.mxu0 0
        %1071 = vmatprep.subr.bf16.mxu0 0
        %1072 = vmatpush2.bf16.msra.mxu0 0
        %1073 = vmatprep.subr.bf16.mxu0 0
        %1074 = vmatpush2.bf16.msra.mxu0 0
        %1075 = vmatprep.subr.bf16.mxu0 0
        %1076 = vmatpush2.bf16.msra.mxu0 0
        %1077 = vmatprep.subr.bf16.mxu0 0
        %1078 = vmatpush2.bf16.msra.mxu0 0
        %1079 = vmatprep.subr.bf16.mxu0 0
        %1080 = vmatpush2.bf16.msra.mxu0 0
        %1081 = vmatprep.mubr.bf16.mxu0 0
        %1082 = vmatmul.mubr.bf16.gmra.mxu0 %v1044
        %v1083 = vpop.f32.mrf.mxu0
        %v1084 = vadd.f32 0.0, %v1083
        %v1085 = vpop.f32.mrf.mxu0
        %v1086 = vpop.f32.mrf.mxu0
        %v1087 = vpop.f32.mrf.mxu0
        %1088 = vdwg.mxu0
        %v1090 = vsel %vm901, %v949, 0
        %v1093 = vsel %vm953, %v715, 0
        %1095 = vmatprep.subr.bf16.mxu0 0
        %1096 = vmatpush1.bf16.msra.mxu0 0
        %1097 = vmatprep.subr.bf16.mxu0 0
        %1098 = vmatpush1.bf16.msra.mxu0 0
        %1099 = vmatprep.subr.bf16.mxu0 0
        %1100 = vmatpush1.bf16.msra.mxu0 0
        %1101 = vmatprep.subr.bf16.mxu0 0
        %1102 = vmatpush1.bf16.msra.mxu0 0
        %1103 = vmatprep.subr.bf16.mxu0 0
        %1104 = vmatpush1.bf16.msra.mxu0 0
        %1105 = vmatprep.subr.bf16.mxu0 0
        %1106 = vmatpush1.bf16.msra.mxu0 0
        %1107 = vmatprep.subr.bf16.mxu0 0
        %1108 = vmatpush1.bf16.msra.mxu0 0
        %1109 = vmatprep.subr.bf16.mxu0 0
        %1110 = vmatpush1.bf16.msra.mxu0 %v1093
        %1111 = vmatprep.subr.bf16.mxu0 0
        %1112 = vmatpush2.bf16.msra.mxu0 0
        %1113 = vmatprep.subr.bf16.mxu0 0
        %1114 = vmatpush2.bf16.msra.mxu0 0
        %1115 = vmatprep.subr.bf16.mxu0 0
        %1116 = vmatpush2.bf16.msra.mxu0 0
        %1117 = vmatprep.subr.bf16.mxu0 0
        %1118 = vmatpush2.bf16.msra.mxu0 0
        %1119 = vmatprep.subr.bf16.mxu0 0
        %1120 = vmatpush2.bf16.msra.mxu0 0
        %1121 = vmatprep.subr.bf16.mxu0 0
        %1122 = vmatpush2.bf16.msra.mxu0 0
        %1123 = vmatprep.subr.bf16.mxu0 0
        %1124 = vmatpush2.bf16.msra.mxu0 0
        %1125 = vmatprep.subr.bf16.mxu0 0
        %1126 = vmatpush2.bf16.msra.mxu0 0
        %1127 = vmatprep.mubr.bf16.mxu0 0
        %1128 = vmatmul.mubr.bf16.gmra.mxu0 %v1090
        %v1129 = vpop.f32.mrf.mxu0
        %v1130 = vadd.f32 0.0, %v1129
        %v1131 = vpop.f32.mrf.mxu0
        %v1132 = vpop.f32.mrf.mxu0
        %v1133 = vpop.f32.mrf.mxu0
        %1134 = vdwg.mxu0
        %v1135 = vcombine.low %v992, %v1084
        %v1136 = vcombine.high %v992, %v1084
        %v1138 = vunpack.c.l.s4 1983009808
        %v1139 = vunpack.c.0.s8 %v1138
        %v1140 = vlaneseq
        %v1141 = vshrl.u32 %v1140, 7
        %v1142 = vsub.s32 %v1139, %v1141
        %v1143 = vrot.slane %v1135, %v1142
        %v1145 = vunpack.c.l.s4 1983009808
        %v1146 = vunpack.c.0.s8 %v1145
        %v1147 = vlaneseq
        %v1148 = vshrl.u32 %v1147, 7
        %v1149 = vsub.s32 %v1146, %v1148
        %v1150 = vrot.slane %v1136, %v1149
        %v1151 = vcombine.low %v1038, %v1130
        %v1152 = vcombine.high %v1038, %v1130
        %v1154 = vunpack.c.l.s4 1983009808
        %v1155 = vunpack.c.0.s8 %v1154
        %v1156 = vlaneseq
        %v1157 = vshrl.u32 %v1156, 7
        %v1158 = vsub.s32 %v1155, %v1157
        %v1159 = vrot.slane %v1151, %v1158
        %v1161 = vunpack.c.l.s4 1983009808
        %v1162 = vunpack.c.0.s8 %v1161
        %v1163 = vlaneseq
        %v1164 = vshrl.u32 %v1163, 7
        %v1165 = vsub.s32 %v1162, %v1164
        %v1166 = vrot.slane %v1152, %v1165
        %v1167 = vcombine.low %v1143, %v1159
        %v1168 = vcombine.high %v1143, %v1159
        %v1170 = vunpack.c.l.s4 1934713408
        %v1171 = vunpack.c.0.s8 %v1170
        %v1172 = vlaneseq
        %v1173 = vshrl.u32 %v1172, 7
        %v1174 = vsub.s32 %v1171, %v1173
        %v1175 = vrot.slane %v1167, %v1174
        %v1177 = vunpack.c.l.s4 1934713408
        %v1178 = vunpack.c.0.s8 %v1177
        %v1179 = vlaneseq
        %v1180 = vshrl.u32 %v1179, 7
        %v1181 = vsub.s32 %v1178, %v1180
        %v1182 = vrot.slane %v1168, %v1181
        %v1183 = vcombine.low %v1150, %v1166
        %v1184 = vcombine.high %v1150, %v1166
        %v1186 = vunpack.c.l.s4 1934713408
        %v1187 = vunpack.c.0.s8 %v1186
        %v1188 = vlaneseq
        %v1189 = vshrl.u32 %v1188, 7
        %v1190 = vsub.s32 %v1187, %v1189
        %v1191 = vrot.slane %v1183, %v1190
        %v1193 = vunpack.c.l.s4 1934713408
        %v1194 = vunpack.c.0.s8 %v1193
        %v1195 = vlaneseq
        %v1196 = vshrl.u32 %v1195, 7
        %v1197 = vsub.s32 %v1194, %v1196
        %v1198 = vrot.slane %v1184, %v1197
        %v1199 = vcombine.high %v1175, 0.0
        %v1200 = vcombine.high %v1182, 0.0
        %v1201 = vcombine.high %v1191, 0.0
        %v1202 = vcombine.high %v1198, 0.0
        %v1203 = vcombine.low %v1175, %v1182
        %v1205 = vunpack.c.l.s4 1983009808
        %v1206 = vunpack.c.0.s8 %v1205
        %v1207 = vlaneseq
        %v1208 = vshrl.u32 %v1207, 7
        %v1209 = vsub.s32 %v1206, %v1208
        %v1210 = vrot.slane %v1203, %v1209
        %v1211 = vcombine.low %v1199, %v1200
        %v1213 = vunpack.c.l.s4 1983009808
        %v1214 = vunpack.c.0.s8 %v1213
        %v1215 = vlaneseq
        %v1216 = vshrl.u32 %v1215, 7
        %v1217 = vsub.s32 %v1214, %v1216
        %v1218 = vrot.slane %v1211, %v1217
        %v1219 = vcombine.low %v1191, %v1198
        %v1221 = vunpack.c.l.s4 1983009808
        %v1222 = vunpack.c.0.s8 %v1221
        %v1223 = vlaneseq
        %v1224 = vshrl.u32 %v1223, 7
        %v1225 = vsub.s32 %v1222, %v1224
        %v1226 = vrot.slane %v1219, %v1225
        %v1227 = vcombine.low %v1201, %v1202
        %v1229 = vunpack.c.l.s4 1983009808
        %v1230 = vunpack.c.0.s8 %v1229
        %v1231 = vlaneseq
        %v1232 = vshrl.u32 %v1231, 7
        %v1233 = vsub.s32 %v1230, %v1232
        %v1234 = vrot.slane %v1227, %v1233
        %v1235 = vcombine.low %v1210, %v1218
        %v1236 = vcombine.high %v1210, %v1218
        %v1238 = vunpack.c.l.s4 1934713408
        %v1239 = vunpack.c.0.s8 %v1238
        %v1240 = vlaneseq
        %v1241 = vshrl.u32 %v1240, 7
        %v1242 = vsub.s32 %v1239, %v1241
        %v1243 = vrot.slane %v1235, %v1242
        %v1245 = vunpack.c.l.s4 1934713408
        %v1246 = vunpack.c.0.s8 %v1245
        %v1247 = vlaneseq
        %v1248 = vshrl.u32 %v1247, 7
        %v1249 = vsub.s32 %v1246, %v1248
        %v1250 = vrot.slane %v1236, %v1249
        %v1251 = vcombine.low %v1226, %v1234
        %v1252 = vcombine.high %v1226, %v1234
        %v1254 = vunpack.c.l.s4 1934713408
        %v1255 = vunpack.c.0.s8 %v1254
        %v1256 = vlaneseq
        %v1257 = vshrl.u32 %v1256, 7
        %v1258 = vsub.s32 %v1255, %v1257
        %v1259 = vrot.slane %v1251, %v1258
        %v1261 = vunpack.c.l.s4 1934713408
        %v1262 = vunpack.c.0.s8 %v1261
        %v1263 = vlaneseq
        %v1264 = vshrl.u32 %v1263, 7
        %v1265 = vsub.s32 %v1262, %v1264
        %v1266 = vrot.slane %v1252, %v1265
        %v1267 = vcombine.low %v1243, %v1259
        %v1268 = vcombine.high %v1243, %v1259
        %v1269 = vcombine.low %v1250, %v1266
        %v1270 = vcombine.high %v1250, %v1266
        %1272 = vrot.lane.b32.xlu0 %v1268, 16
        %v1273 = vpop.permute.xlu0 %1272
        %1276 = vrot.lane.b32.xlu0 %v1269, 32
        %v1277 = vpop.permute.xlu0 %1276
        %1280 = vrot.lane.b32.xlu0 %v1270, 48
        %v1281 = vpop.permute.xlu0 %1280
        %v1283 = vsel %vm716, %v1267, %v1273
        %v1284 = vsel %vm219, %v1283, %v1277
        %vm1285 = vcmask 392192
        %v1286 = vsel %vm1285, %v1284, %v1281
        %v1287 = vpack.c.bf16 %v1286, %v1286
        %v1288 = vld [vmem:[%s2] sm:$0xf]
        %v1289 = vld [vmem:[%s2 + $0x4] sm:$0xf]
        %v1290 = vld [vmem:[%s2 + $0x8] sm:$0xf]
        %v1291 = vld [vmem:[%s2 + $0xc] sm:$0xf]
        %v1292 = vld [vmem:[%s2 + $0x10] sm:$0xf]
        %v1293 = vld [vmem:[%s2 + $0x14] sm:$0xf]
        %v1294 = vld [vmem:[%s2 + $0x18] sm:$0xf]
        %v1295 = vld [vmem:[%s2 + $0x1c] sm:$0xf]
        %v1296 = vld [vmem:[%s3] sm:$0x1]
        %v1298 = vlaneseq
        %v1299 = vshrl.u32 %v1298, 7
        %v1300 = vsub.s32 0, %v1299
        %v1301 = vrot.slane %v1296, %v1300
        %v1311 = vunpack.c.l.b16 %v1288
        %v1312 = vunpack.c.l.b16 %v1289
        %v1313 = vunpack.c.l.b16 %v1290
        %v1314 = vunpack.c.l.b16 %v1291
        %v1315 = vunpack.c.l.b16 %v1292
        %v1316 = vunpack.c.l.b16 %v1293
        %v1317 = vunpack.c.l.b16 %v1294
        %v1318 = vunpack.c.l.b16 %v1295
        %v1319 = vpack.c.b16 %v1312, %v1311
        %v1320 = vpack.c.b16 %v1314, %v1313
        %v1321 = vpack.c.b16 %v1316, %v1315
        %v1322 = vpack.c.b16 %v1318, %v1317
        %vm1327 = vcmask 523264
        %v1329 = vsel %vm1327, %v1287, 0
        %1331 = vmatprep.subr.bf16.mxu0 0
        %1332 = vmatpush1.bf16.msra.mxu0 0
        %1333 = vmatprep.subr.bf16.mxu0 0
        %1334 = vmatpush1.bf16.msra.mxu0 0
        %1335 = vmatprep.subr.bf16.mxu0 0
        %1336 = vmatpush1.bf16.msra.mxu0 0
        %1337 = vmatprep.subr.bf16.mxu0 0
        %1338 = vmatpush1.bf16.msra.mxu0 0
        %1339 = vmatprep.subr.bf16.mxu0 0
        %1340 = vmatpush1.bf16.msra.mxu0 %v1322
        %1341 = vmatprep.subr.bf16.mxu0 0
        %1342 = vmatpush1.bf16.msra.mxu0 %v1321
        %1343 = vmatprep.subr.bf16.mxu0 0
        %1344 = vmatpush1.bf16.msra.mxu0 %v1320
        %1345 = vmatprep.subr.bf16.mxu0 0
        %1346 = vmatpush1.bf16.msra.mxu0 %v1319
        %1347 = vmatprep.subr.bf16.mxu0 0
        %1348 = vmatpush2.bf16.msra.mxu0 0
        %1349 = vmatprep.subr.bf16.mxu0 0
        %1350 = vmatpush2.bf16.msra.mxu0 0
        %1351 = vmatprep.subr.bf16.mxu0 0
        %1352 = vmatpush2.bf16.msra.mxu0 0
        %1353 = vmatprep.subr.bf16.mxu0 0
        %1354 = vmatpush2.bf16.msra.mxu0 0
        %1355 = vmatprep.subr.bf16.mxu0 0
        %1356 = vmatpush2.bf16.msra.mxu0 0
        %1357 = vmatprep.subr.bf16.mxu0 0
        %1358 = vmatpush2.bf16.msra.mxu0 0
        %1359 = vmatprep.subr.bf16.mxu0 0
        %1360 = vmatpush2.bf16.msra.mxu0 0
        %1361 = vmatprep.subr.bf16.mxu0 0
        %1362 = vmatpush2.bf16.msra.mxu0 0
        %1363 = vmatprep.mubr.bf16.mxu0 0
        %1364 = vmatmul.mubr.bf16.gmra.mxu0 %v1329
        %v1365 = vpop.f32.mrf.mxu0
        %v1366 = vadd.f32 %v1301, %v1365
        %v1367 = vpop.f32.mrf.mxu0
        %v1368 = vpop.f32.mrf.mxu0
        %v1369 = vpop.f32.mrf.mxu0
        %1370 = vdwg.mxu0
        %1371 = vst.msk [vmem:[%s188] sm:$0xff] %vm219, %v1366
        %s1372 = sand.u32 %s115, 1
        %s1373 = scalar_lea.sflag [#allocation3], %s1372
        %s1374 = sand.u32 %s115, 1
        %s1375 = smul.addr %s1374, 8
        %s1376 = scalar_lea.vmem [#allocation2], %s1375
        // Predicated region
        $region37: #{tpu_custom_call.1} parent=35 // pred_check
          %p1377 = pneg %p125
        $region38: #{tpu_custom_call.1} parent=35 // pred_check_branch
          %1379 = sbr.rel (%p1377) target = $region40
        $region39: #{tpu_custom_call.1} parent=35 // pred_region
          %s1381 = ssub.s32 128, 128
          %1382 = vsyncadd %s1373, %s1381
          %s1383 = smul.addr %s18, 128
          %s1384 = scalar_lea.hbm %s4, %s1383
          %s1386 = sshll.u32 %s1376, 4
          %s1387 = int_to_ptr.vmem [resolvable:$true] %s1386
          %1389 = dma.vmem_to_hbm [thread:$0]  %s1387, 128, %s1384, %s1373
        $region40: #{tpu_custom_call.1} parent=35 // pred_fallthru
          _
      $region36: #{tpu_custom_call.1} parent=5 // pred_fallthru
        _
      %p1390 = scmp.le.s32.totalorder 2, %s13
      // Predicated region
      $region41: #{tpu_custom_call.1} parent=5 // pred_check
        %p1391 = pneg %p1390
      $region42: #{tpu_custom_call.1} parent=5 // pred_check_branch
        %1393 = sbr.rel (%p1391) target = $region44
      $region43: #{tpu_custom_call.1} parent=5 // pred_region
        %s1394 = ssub.s32 %s13, 2
        // Predicated region
        $region45: #{tpu_custom_call.1} parent=43 // pred_check
          %p1395 = pneg %p131
        $region46: #{tpu_custom_call.1} parent=43 // pred_check_branch
          %1397 = sbr.rel (%p1395) target = $region48
        $region47: #{tpu_custom_call.1} parent=43 // pred_region
          %s1398 = sand.u32 %s116, 1
          %s1399 = scalar_lea.sflag [#allocation3], %s1398
          %s1400 = sand.u32 %s116, 1
          %s1401 = smul.addr %s1400, 8
          %s1402 = scalar_lea.vmem [#allocation2], %s1401
          %1403 = dma.done %s1399, 128
        $region48: #{tpu_custom_call.1} parent=43 // pred_fallthru
          _
      $region44: #{tpu_custom_call.1} parent=5 // pred_fallthru
        _
    $region6: #{tpu_custom_call.1} parent=1 // loop_footer
      %s17 = sadd.s32 1, %s13
    $region7: #{tpu_custom_call.1} parent=1 // loop_footer_branch
      %12 = sbr.rel target = $region3
    $region8: #{tpu_custom_call.1} parent=1 // loop_exit
      _
    %1404 = vsyncpa [#allocation3], 1
    %s1405 = scalar_lea.sflag [#allocation3], 1
    %1406 = vsyncpa %s1405, 1

</llo_original>
